<compile_context>
chip_gen: v7x
topology: tpu7x:2x2x1
jax: 0.10.0
libtpu: 0.0.40
codegen_flags: <defaults>
</compile_context>

<pallas_src>
import jax
import jax.numpy as jnp
from jax.experimental import pallas as pl
from jax.experimental.pallas import tpu as pltpu

_LANES = 128
_TARGET_BLOCK_BYTES = 8 * 1024 * 1024   # ~8 MiB per pipeline buffer
_VMEM_LIMIT_BYTES = 48 * 1024 * 1024    # 4 x 8 MiB buffers + headroom; < 64 MiB (v7x)


def _mish_kernel(x_ref, o_ref):
    xf = x_ref[...].astype(jnp.float32)
    # mish(x) = x * tanh(softplus(x)).
    # tanh(log1p(e)) == n / (n + 2) with e = exp(x), n = e * (e + 2):
    # single EUP transcendental (exp) + one divide instead of exp/log1p/tanh.
    e = jnp.exp(jnp.minimum(xf, 20.0))
    n = e * (e + 2.0)
    t = n * pl.reciprocal(n + 2.0, approx=False)
    # PyTorch softplus threshold: for x > 20, softplus(x) -> x, tanh(x) -> ~1.
    y = jnp.where(xf > 20.0, xf, xf * t)
    o_ref[...] = y.astype(o_ref.dtype)


def _mish_jnp(x):
    # Reference-style path for tiny (< 128 element) unaligned tails.
    xf = x.astype(jnp.float32)
    return (xf * jnp.tanh(jax.nn.softplus(xf))).astype(x.dtype)


def _row_align(dtype) -> int:
    # Full sublane packing: 8 rows/vreg for 4-byte, 16 for 2-byte, 32 for 1-byte.
    itemsize = jnp.dtype(dtype).itemsize
    return 8 * max(1, 4 // itemsize)


def _round_up(v: int, m: int) -> int:
    return ((v + m - 1) // m) * m


def _choose_block_rows(rows: int, lanes: int, dtype) -> int:
    """Byte-targeted, sublane-aligned, megacore-balanced block row count."""
    itemsize = jnp.dtype(dtype).itemsize
    align = _row_align(dtype)
    # Target ~8 MiB per block independent of dtype.
    target = max(align, _TARGET_BLOCK_BYTES // (lanes * itemsize))
    steps = pl.cdiv(rows, target)
    if steps <= 4:
        if rows <= 2 * align:
            steps = 1                       # too small to be worth splitting
        else:
            steps = 2 * pl.cdiv(steps, 2)   # even # of near-equal blocks (v7x: 2 TCs)
    # Near-equal blocks, rounded up to a fully-packed sublane multiple;
    # the (possibly ragged) last block is masked by Pallas.
    return _round_up(pl.cdiv(rows, steps), align)


def _mish_2d(x2d: jax.Array) -> jax.Array:
    rows, lanes = x2d.shape
    br = _choose_block_rows(rows, lanes, x2d.dtype)
    grid = (pl.cdiv(rows, br),)
    n_elems = rows * lanes
    itemsize = jnp.dtype(x2d.dtype).itemsize

    return pl.pallas_call(
        _mish_kernel,
        out_shape=jax.ShapeDtypeStruct((rows, lanes), x2d.dtype),
        grid_spec=pltpu.PrefetchScalarGridSpec(
            num_scalar_prefetch=0,
            grid=grid,
            in_specs=[pl.BlockSpec((br, lanes), lambda i: (i, 0))],
            out_specs=pl.BlockSpec((br, lanes), lambda i: (i, 0)),
        ),
        compiler_params=pltpu.CompilerParams(
            dimension_semantics=("parallel",),
            vmem_limit_bytes=_VMEM_LIMIT_BYTES,
        ),
        cost_estimate=pl.CostEstimate(
            flops=6 * n_elems,
            transcendentals=n_elems,
            bytes_accessed=2 * n_elems * itemsize,
        ),
    )(x2d)


def mish(x: jax.Array) -> jax.Array:
    """Elementwise mish(x) = x * tanh(softplus(x)); same shape & dtype as x."""
    orig_shape = x.shape
    n = x.size
    if n == 0:
        return x

    flat = x.reshape(-1)
    n_main = (n // _LANES) * _LANES   # kernel path only needs lane alignment

    if n_main == n:
        # Fully lane-aligned (the common NN-activation case): no pad, no slice.
        out = _mish_2d(flat.reshape(n // _LANES, _LANES)).reshape(-1)
    elif n_main == 0:
        # Tiny input (< 128 elements): not worth a kernel launch.
        out = _mish_jnp(flat)
    else:
        # Rare unaligned case: bulk through the kernel, <128-element tail via
        # jnp.  The combine necessarily re-materializes the output once since
        # the final array must hold exactly n elements (pad/slice or DUS on a
        # padded slab would cost the same extra pass); aligned inputs never
        # take this branch.
        main = _mish_2d(flat[:n_main].reshape(n_main // _LANES, _LANES)).reshape(-1)
        tail = _mish_jnp(flat[n_main:])
        out = jnp.concatenate([main, tail])

    return out.reshape(orig_shape)


def _mish_ref(x):
    xf = x.astype(jnp.float32)
    return (xf * jnp.tanh(jax.nn.softplus(xf))).astype(x.dtype)


if __name__ == "__main__":
    key = jax.random.PRNGKey(0)

    # (N, C, H, W) as the PyTorch module would see for a conv activation.
    x = jax.random.normal(key, (2, 4, 16, 16), dtype=jnp.float32)
    y = jax.block_until_ready(mish(x))
    y_ref = _mish_ref(x)
    assert y.shape == x.shape and y.dtype == x.dtype
    assert jnp.allclose(y, y_ref, atol=1e-5, rtol=1e-5)

    # Tiny unaligned input (< 128 elements) -> pure-jnp path.
    x2 = 12.0 * jax.random.normal(jax.random.PRNGKey(1), (3, 5, 7), dtype=jnp.float32)
    y2 = jax.block_until_ready(mish(x2))
    assert jnp.allclose(y2, _mish_ref(x2), atol=1e-5, rtol=1e-5)

    # Unaligned size with an aligned bulk (37*50 = 1850 = 14*128 + 58):
    # exercises ragged sublane blocks, the tail combine, and x > 20 passthrough.
    x3 = 12.0 * jax.random.normal(jax.random.PRNGKey(2), (37, 50), dtype=jnp.float32)
    y3 = jax.block_until_ready(mish(x3))
    assert jnp.allclose(y3, _mish_ref(x3), atol=1e-5, rtol=1e-5)

    # bf16 path: exercises dtype-dependent (byte-targeted) block sizing.
    x4 = jax.random.normal(jax.random.PRNGKey(3), (4, 8, 32), dtype=jnp.bfloat16)
    y4 = jax.block_until_ready(mish(x4))
    assert y4.dtype == jnp.bfloat16
    assert jnp.allclose(y4.astype(jnp.float32), _mish_ref(x4).astype(jnp.float32),
                        atol=2e-2, rtol=2e-2)

    print("KERNEL_OK")
</pallas_src>

<mosaic_0001>
module attributes {stable_mosaic.version = 11 : i64} {
  func.func @_mish_kernel(%arg0: i32, %arg1: memref<16x128xf32, #tpu.memory_space<vmem>>, %arg2: memref<16x128xf32, #tpu.memory_space<vmem>>) attributes {dimension_semantics = [#tpu.dimension_semantics<parallel>], iteration_bounds = array<i64: 1>, scalar_prefetch = 0 : i64, scratch_operands = 0 : i64, tpu.core_type = #tpu.core_type<tc>, window_params = [{transform_indices = @transform_0, window_bounds = array<i64: 16, 128>}, {transform_indices = @transform_1, window_bounds = array<i64: 16, 128>}]} {
    %c0 = arith.constant 0 : index
    %c0_0 = arith.constant 0 : index
    %0 = vector.load %arg1[%c0, %c0_0] : memref<16x128xf32, #tpu.memory_space<vmem>>, vector<16x128xf32>
    %cst = arith.constant 2.000000e+01 : f32
    %1 = vector.broadcast %cst : f32 to vector<16x128xf32>
    %2 = arith.minimumf %0, %1 : vector<16x128xf32>
    %3 = math.exp %2 : vector<16x128xf32>
    %cst_1 = arith.constant 2.000000e+00 : f32
    %4 = vector.broadcast %cst_1 : f32 to vector<16x128xf32>
    %5 = arith.addf %3, %4 : vector<16x128xf32>
    %6 = arith.mulf %3, %5 : vector<16x128xf32>
    %cst_2 = arith.constant 2.000000e+00 : f32
    %7 = vector.broadcast %cst_2 : f32 to vector<16x128xf32>
    %8 = arith.addf %6, %7 : vector<16x128xf32>
    %9 = tpu.reciprocal %8 : vector<16x128xf32> -> vector<16x128xf32>
    %10 = arith.mulf %6, %9 : vector<16x128xf32>
    %cst_3 = arith.constant 2.000000e+01 : f32
    %11 = vector.broadcast %cst_3 : f32 to vector<16x128xf32>
    %12 = arith.cmpf ogt, %0, %11 : vector<16x128xf32>
    %13 = arith.mulf %0, %10 : vector<16x128xf32>
    %14 = arith.select %12, %0, %13 : vector<16x128xi1>, vector<16x128xf32>
    %c0_4 = arith.constant 0 : index
    %c0_5 = arith.constant 0 : index
    %15 = vector.load %arg2[%c0_4, %c0_5] : memref<16x128xf32, #tpu.memory_space<vmem>>, vector<16x128xf32>
    tpu.vector_store %arg2[%c0_4, %c0_5], %14 {strides = array<i32>} : memref<16x128xf32, #tpu.memory_space<vmem>>, vector<16x128xf32>,
    return
  }
  func.func @transform_0(%arg0: i32) -> (i32, i32) {
    %c0_i32 = arith.constant 0 : i32
    %c0_i32_0 = arith.constant 0 : i32
    return %arg0, %c0_i32 : i32, i32
  }
  func.func @transform_1(%arg0: i32) -> (i32, i32) {
    %c0_i32 = arith.constant 0 : i32
    %c0_i32_0 = arith.constant 0 : i32
    return %arg0, %c0_i32 : i32, i32
  }
}

</mosaic_0001>

<llo_original>
// kernel: tpu_custom_call.1
$region0: #{tpu_custom_call.1}
  #allocation0 [shape = 'u32[]', space=smem, size = 0x4, offset = 0x4, fixed_abs, tag = 'smem constant byte address 0x4 - core index']
  #allocation1 [shape = 'u32[144,128]{1,0:T(1,128)}', space=vmem, size = 0x12000, scoped, tag = 'internal scratch']
  %s0 = inlined_call_operand.hbm [shape: f32[16,128], index: 0, kind: input, shape index: {}]
  %s1 = inlined_call_operand.hbm [shape: f32[16,128], index: 1, kind: output, shape index: {}]
  %s2 = sld [smem:[#allocation0]]
  $region18: #{tpu_custom_call.1} parent=0
    _
  %s4 = ssub.s32 1, %s2
  %s5 = scalar_select 0, %s4, %s2
  $region1: #{tpu_custom_call.1} parent=0
    #allocation2 [shape = 'u8[8192]{0}', space=vmem, size = 0x2000, scoped, tag = 'input window, operand 0, single buffered']
    #allocation3 [shape = 's32[1]{0}', space=sflag, size = 0x4, scoped, tag = 'scoped memory for tpu_custom_call.1']
    #allocation4 [shape = 's32[1]{0}', space=sflag, size = 0x4, scoped, tag = 'scoped memory for tpu_custom_call.1']
    #allocation5 [shape = 'u8[8192]{0}', space=vmem, size = 0x2000, scoped, tag = 'output window, operand 0, single buffered']
    %6 = vsyncpa [#allocation3], 0
    %7 = vsyncpa [#allocation4], 0
    // Predicated region
    $region2: #{tpu_custom_call.1} parent=1 // pred_check
      _
    $region3: #{tpu_custom_call.1} parent=1 // pred_check_branch
      %9 = sbr.rel (0) target = $region5
    $region4: #{tpu_custom_call.1} parent=1 // pred_region
      %s11 = ssub.s32 256, 256
      %12 = vsyncadd [#allocation3], %s11
      %s13 = sshll.u32 [#allocation2], 4
      %s14 = int_to_ptr.vmem [resolvable:$true] %s13
      %19 = dma.hbm_to_vmem [thread:$0]  %s0, 256, %s14, [#allocation3], 128, 128, 8
    $region5: #{tpu_custom_call.1} parent=1 // pred_fallthru
      _
    // Predicated region
    $region6: #{tpu_custom_call.1} parent=1 // pred_check
      _
    $region7: #{tpu_custom_call.1} parent=1 // pred_check_branch
      %21 = sbr.rel (0) target = $region9
    $region8: #{tpu_custom_call.1} parent=1 // pred_region
      %22 = dma.done [#allocation3], 256
    $region9: #{tpu_custom_call.1} parent=1 // pred_fallthru
      _
    %v23 = vld [vmem:[#allocation2] sm:$0xff]
    %v24 = vld [vmem:[#allocation2 + $0x8] sm:$0xff]
    %v25 = vmin.f32 %v23, 20.0
    %v26 = vmin.f32 %v24, 20.0
    %v27 = vmul.f32 %v25, 1.442695
    %v28 = vpow.pop %v27
    %v29 = vmul.f32 %v26, 1.442695
    %v30 = vpow.pop %v29
    %v31 = vadd.f32 %v28, 2.0
    %v32 = vadd.f32 %v30, 2.0
    %v33 = vmul.f32 %v28, %v31
    %v34 = vmul.f32 %v30, %v32
    %v35 = vadd.f32 %v33, 2.0
    %v36 = vadd.f32 %v34, 2.0
    %v37 = vrcp.pop %v35
    %v38 = vrcp.pop %v36
    %v39 = vmul.f32 %v33, %v37
    %v40 = vmul.f32 %v34, %v38
    %vm41 = vcmp.gt.f32.partialorder %v23, 20.0
    %vm42 = vcmp.gt.f32.partialorder %v24, 20.0
    %v43 = vmul.f32 %v23, %v39
    %v44 = vmul.f32 %v24, %v40
    %v45 = vsel %vm41, %v23, %v43
    %v46 = vsel %vm42, %v24, %v44
    %47 = vst [vmem:[#allocation5] sm:$0xff] %v45
    %48 = vst [vmem:[#allocation5 + $0x8] sm:$0xff] %v46
    // Predicated region
    $region10: #{tpu_custom_call.1} parent=1 // pred_check
      _
    $region11: #{tpu_custom_call.1} parent=1 // pred_check_branch
      %50 = sbr.rel (0) target = $region13
    $region12: #{tpu_custom_call.1} parent=1 // pred_region
      %s52 = ssub.s32 256, 256
      %53 = vsyncadd [#allocation4], %s52
      %s54 = sshll.u32 [#allocation5], 4
      %s55 = int_to_ptr.vmem [resolvable:$true] %s54
      %60 = dma.vmem_to_hbm [thread:$0]  %s55, 256, %s1, [#allocation4], 128, 128, 8
    $region13: #{tpu_custom_call.1} parent=1 // pred_fallthru
      _
    // Predicated region
    $region14: #{tpu_custom_call.1} parent=1 // pred_check
      _
    $region15: #{tpu_custom_call.1} parent=1 // pred_check_branch
      %62 = sbr.rel (0) target = $region17
    $region16: #{tpu_custom_call.1} parent=1 // pred_region
      %63 = dma.done [#allocation4], 256
    $region17: #{tpu_custom_call.1} parent=1 // pred_fallthru
      _
    %64 = vsyncpa [#allocation3], 1
    %65 = vsyncpa [#allocation4], 1

</llo_original>
